<compile_context>
chip_gen: v6e
topology: v6e:2x2x1
jax: 0.10.0
libtpu: 0.0.40
codegen_flags: <defaults>
</compile_context>

<pallas_src>
import functools

import jax
import jax.numpy as jnp
from jax.experimental import pallas as pl
from jax.experimental.pallas import tpu as pltpu


def _round_up(x, m):
    return ((x + m - 1) // m) * m


def _decoder_kernel(eps,                       # static python float
                    src_ref, tgt_ref,
                    we_ref, be_ref,            # expand: Linear(2 -> D)
                    gamma_ref, beta_ref,       # LayerNorm(D)
                    w1_ref, b1_ref,            # GLU.linear1 (D -> D)
                    w2_ref, b2_ref,            # GLU.linear2 (D -> D)
                    w34_ref, b34_ref,          # fused GLU.linear3 @ liner (D -> out_pad)
                    out_ref):
    src = src_ref[...].astype(jnp.float32)
    tgt = tgt_ref[...].astype(jnp.float32)
    we = we_ref[...].astype(jnp.float32)

    # tgt = self.expand(tgt): K=2 contraction done as two broadcast FMAs on the VPU
    # instead of a (heavily padded) MXU matmul.
    t = (tgt[:, 0:1] * we[0:1, :]
         + tgt[:, 1:2] * we[1:2, :]
         + be_ref[...].astype(jnp.float32))

    # h = self.layer_norm(src + tgt)   (biased variance, like nn.LayerNorm), in f32.
    x = src + t
    mean = jnp.mean(x, axis=-1, keepdims=True)
    var = jnp.mean((x - mean) * (x - mean), axis=-1, keepdims=True)
    h = (x - mean) * jax.lax.rsqrt(var + eps)
    h = h * gamma_ref[...].astype(jnp.float32) + beta_ref[...].astype(jnp.float32)

    # GLU: u = silu(linear1(h)); v = linear2(h); then fused (u*v) @ (w3 @ w4).
    hc = h.astype(w1_ref.dtype)   # bf16 (or f32) operands, f32 accumulation
    u = jnp.dot(hc, w1_ref[...], preferred_element_type=jnp.float32) \
        + b1_ref[...].astype(jnp.float32)
    u = u * jax.nn.sigmoid(u)                  # SiLU
    v = jnp.dot(hc, w2_ref[...], preferred_element_type=jnp.float32) \
        + b2_ref[...].astype(jnp.float32)

    uv = (u * v).astype(w34_ref.dtype)
    y = jnp.dot(uv, w34_ref[...], preferred_element_type=jnp.float32) \
        + b34_ref[...].astype(jnp.float32)

    out_ref[...] = y.astype(out_ref.dtype)


def decoder_forward(src, tgt, params, *, eps, tile_m=512, weight_dtype=jnp.float32):
    """src: (B, S, D) f32, tgt: (B, S, 2) f32 -> (B, S, out_size)."""
    B, S, D = src.shape
    N = B * S
    (we, be, gamma, beta, w1, b1, w2, b2, w3, b3, w4, b4) = params
    out_size = w4.shape[1]

    hp = jax.lax.Precision.HIGHEST
    # Fold linear3 + liner (linear-linear, no nonlinearity between them):
    #   ((u*v) @ w3 + b3) @ w4 + b4 == (u*v) @ (w3 @ w4) + (b3 @ w4 + b4)
    w34 = jnp.dot(w3, w4, precision=hp)
    b34 = jnp.dot(b3, w4, precision=hp) + b4

    # Lane-dense output: pad output columns to a multiple of 128 (unmasked vst).
    out_pad = _round_up(out_size, 128)
    if out_pad != out_size:
        w34 = jnp.pad(w34, ((0, 0), (0, out_pad - out_size)))
        b34 = jnp.pad(b34, ((0, 0), (0, out_pad - out_size)))

    # Heavy matmul weights optionally in bf16 (f32 accumulation inside the kernel).
    w1c = w1.astype(weight_dtype)
    w2c = w2.astype(weight_dtype)
    w34c = w34.astype(weight_dtype)

    # Row tile: big (default 512) for MXU/pipeline utilization, clamped for small N,
    # with N padded up to a multiple of tile_m (pad rows are sliced off afterwards).
    tile_m = max(8, _round_up(min(tile_m, _round_up(N, 8)), 8))
    N_pad = _round_up(N, tile_m)

    src2 = src.reshape(N, D)
    tgt2 = tgt.reshape(N, 2)
    if N_pad != N:
        src2 = jnp.pad(src2, ((0, N_pad - N), (0, 0)))
        tgt2 = jnp.pad(tgt2, ((0, N_pad - N), (0, 0)))

    weights = (we, be, gamma, beta, w1c, b1, w2c, b2, w34c, b34)

    # VMEM budget: double-buffered row tiles + (double-buffered) resident weights
    # + elementwise intermediates, with headroom.
    io_bytes = 2 * 4 * (tile_m * D + tile_m * 2 + tile_m * out_pad)
    w_bytes = sum(int(w.size) * w.dtype.itemsize for w in weights)
    act_bytes = 8 * tile_m * max(D, out_pad) * 4
    vmem_bytes = int(min(max(2 * w_bytes + io_bytes + act_bytes + (4 << 20), 16 << 20),
                         100 << 20))

    def full_spec(arr):
        # Whole (small) parameter array resident in VMEM; same block every grid step.
        # (On v7x, pipeline_mode=pl.Buffered(1) on these would halve their VMEM cost.)
        return pl.BlockSpec(arr.shape, lambda i: (0, 0))

    grid = (N_pad // tile_m,)
    kernel = functools.partial(_decoder_kernel, float(eps))

    out2 = pl.pallas_call(
        kernel,
        out_shape=jax.ShapeDtypeStruct((N_pad, out_pad), src.dtype),
        grid_spec=pltpu.PrefetchScalarGridSpec(
            num_scalar_prefetch=0,
            grid=grid,
            in_specs=[
                pl.BlockSpec((tile_m, D), lambda i: (i, 0)),   # src rows
                pl.BlockSpec((tile_m, 2), lambda i: (i, 0)),   # tgt rows
                full_spec(we), full_spec(be),
                full_spec(gamma), full_spec(beta),
                full_spec(w1c), full_spec(b1),
                full_spec(w2c), full_spec(b2),
                full_spec(w34c), full_spec(b34),
            ],
            out_specs=pl.BlockSpec((tile_m, out_pad), lambda i: (i, 0)),
        ),
        compiler_params=pltpu.CompilerParams(
            dimension_semantics=("parallel",),
            vmem_limit_bytes=vmem_bytes),
    )(src2, tgt2, *weights)

    return out2[:N, :out_size].reshape(B, S, out_size)


def init_params(key, d_model, out_size):
    """Deterministic synthetic parameters.  Weights stored as (in, out)."""
    ks = jax.random.split(key, 10)

    def lin(k, fan_in, fan_out):
        kw, kb = jax.random.split(k)
        bound = 1.0 / jnp.sqrt(fan_in)
        w = jax.random.uniform(kw, (fan_in, fan_out), jnp.float32, -bound, bound)
        b = jax.random.uniform(kb, (1, fan_out), jnp.float32, -bound, bound)
        return w, b

    we, be = lin(ks[0], 2, d_model)            # expand
    gamma = jnp.ones((1, d_model), jnp.float32)
    beta = jnp.zeros((1, d_model), jnp.float32)
    w1, b1 = lin(ks[1], d_model, d_model)      # GLU.linear1
    w2, b2 = lin(ks[2], d_model, d_model)      # GLU.linear2
    w3, b3 = lin(ks[3], d_model, d_model)      # GLU.linear3 (out_size == d_model in Decoder)
    w4, b4 = lin(ks[4], d_model, out_size)     # liner
    return (we, be, gamma, beta, w1, b1, w2, b2, w3, b3, w4, b4)


def reference_forward(src, tgt, params, *, eps):
    (we, be, gamma, beta, w1, b1, w2, b2, w3, b3, w4, b4) = params
    hp = jax.lax.Precision.HIGHEST
    t = jnp.dot(tgt, we, precision=hp) + be
    x = src + t
    mean = jnp.mean(x, axis=-1, keepdims=True)
    var = jnp.mean((x - mean) ** 2, axis=-1, keepdims=True)
    h = (x - mean) * jax.lax.rsqrt(var + eps) * gamma + beta
    u = jnp.dot(h, w1, precision=hp) + b1
    u = u * jax.nn.sigmoid(u)
    v = jnp.dot(h, w2, precision=hp) + b2
    o = jnp.dot(u * v, w3, precision=hp) + b3
    return jnp.dot(o, w4, precision=hp) + b4


if __name__ == "__main__":
    d_model = 32
    out_size = 16
    eps = 1e-5
    B, S = 2, 8

    key = jax.random.PRNGKey(0)
    k_src, k_tgt, k_p = jax.random.split(key, 3)
    src = jax.random.normal(k_src, (B, S, d_model), jnp.float32)
    tgt = jax.random.normal(k_tgt, (B, S, 2), jnp.float32)
    params = init_params(k_p, d_model, out_size)

    ref = reference_forward(src, tgt, params, eps=eps)

    # f32-weight path (tight check; w3@w4 fusion only reassociates f32 math).
    out_f32 = jax.block_until_ready(
        decoder_forward(src, tgt, params, eps=eps, weight_dtype=jnp.float32))
    assert out_f32.shape == (B, S, out_size)
    assert jnp.allclose(out_f32, ref, atol=2e-3, rtol=2e-3), "f32 kernel mismatch vs reference"

    # bf16-weight path (matmul operands bf16, f32 accumulation) — looser tolerance.
    out_bf16 = jax.block_until_ready(
        decoder_forward(src, tgt, params, eps=eps, weight_dtype=jnp.bfloat16))
    assert out_bf16.shape == (B, S, out_size)
    assert jnp.allclose(out_bf16, ref, atol=6e-2, rtol=6e-2), "bf16 kernel mismatch vs reference"

    print("KERNEL_OK")
</pallas_src>

<mosaic_0001>
module attributes {stable_mosaic.version = 11 : i64} {
  func.func @_decoder_kernel(%arg0: i32, %arg1: memref<16x32xf32, #tpu.memory_space<vmem>>, %arg2: memref<16x2xf32, #tpu.memory_space<vmem>>, %arg3: memref<2x32xf32, #tpu.memory_space<vmem>>, %arg4: memref<1x32xf32, #tpu.memory_space<vmem>>, %arg5: memref<1x32xf32, #tpu.memory_space<vmem>>, %arg6: memref<1x32xf32, #tpu.memory_space<vmem>>, %arg7: memref<32x32xf32, #tpu.memory_space<vmem>>, %arg8: memref<1x32xf32, #tpu.memory_space<vmem>>, %arg9: memref<32x32xf32, #tpu.memory_space<vmem>>, %arg10: memref<1x32xf32, #tpu.memory_space<vmem>>, %arg11: memref<32x128xf32, #tpu.memory_space<vmem>>, %arg12: memref<1x128xf32, #tpu.memory_space<vmem>>, %arg13: memref<16x128xf32, #tpu.memory_space<vmem>>) attributes {dimension_semantics = [#tpu.dimension_semantics<parallel>], iteration_bounds = array<i64: 1>, scalar_prefetch = 0 : i64, scratch_operands = 0 : i64, tpu.core_type = #tpu.core_type<tc>, window_params = [{transform_indices = @transform_0, window_bounds = array<i64: 16, 32>}, {transform_indices = @transform_1, window_bounds = array<i64: 16, 2>}, {pipeline_mode = #tpu.pipeline_mode<synchronous>, transform_indices = @transform_2, window_bounds = array<i64: 2, 32>}, {pipeline_mode = #tpu.pipeline_mode<synchronous>, transform_indices = @transform_3, window_bounds = array<i64: 1, 32>}, {pipeline_mode = #tpu.pipeline_mode<synchronous>, transform_indices = @transform_4, window_bounds = array<i64: 1, 32>}, {pipeline_mode = #tpu.pipeline_mode<synchronous>, transform_indices = @transform_5, window_bounds = array<i64: 1, 32>}, {pipeline_mode = #tpu.pipeline_mode<synchronous>, transform_indices = @transform_6, window_bounds = array<i64: 32, 32>}, {pipeline_mode = #tpu.pipeline_mode<synchronous>, transform_indices = @transform_7, window_bounds = array<i64: 1, 32>}, {pipeline_mode = #tpu.pipeline_mode<synchronous>, transform_indices = @transform_8, window_bounds = array<i64: 32, 32>}, {pipeline_mode = #tpu.pipeline_mode<synchronous>, transform_indices = @transform_9, window_bounds = array<i64: 1, 32>}, {pipeline_mode = #tpu.pipeline_mode<synchronous>, transform_indices = @transform_10, window_bounds = array<i64: 32, 128>}, {pipeline_mode = #tpu.pipeline_mode<synchronous>, transform_indices = @transform_11, window_bounds = array<i64: 1, 128>}, {transform_indices = @transform_12, window_bounds = array<i64: 16, 128>}]} {
    %c0 = arith.constant 0 : index
    %c0_0 = arith.constant 0 : index
    %0 = vector.load %arg1[%c0, %c0_0] : memref<16x32xf32, #tpu.memory_space<vmem>>, vector<16x32xf32>
    %c0_1 = arith.constant 0 : index
    %c0_2 = arith.constant 0 : index
    %1 = vector.load %arg2[%c0_1, %c0_2] : memref<16x2xf32, #tpu.memory_space<vmem>>, vector<16x2xf32>
    %c0_3 = arith.constant 0 : index
    %c0_4 = arith.constant 0 : index
    %2 = vector.load %arg3[%c0_3, %c0_4] : memref<2x32xf32, #tpu.memory_space<vmem>>, vector<2x32xf32>
    %3 = vector.extract_strided_slice %1 {offsets = [0, 0], sizes = [16, 1], strides = [1, 1]} : vector<16x2xf32> to vector<16x1xf32>
    %4 = vector.extract_strided_slice %2 {offsets = [0, 0], sizes = [1, 32], strides = [1, 1]} : vector<2x32xf32> to vector<1x32xf32>
    %5 = vector.broadcast %3 : vector<16x1xf32> to vector<16x32xf32>
    %6 = vector.broadcast %4 : vector<1x32xf32> to vector<16x32xf32>
    %7 = arith.mulf %5, %6 : vector<16x32xf32>
    %8 = vector.extract_strided_slice %1 {offsets = [0, 1], sizes = [16, 1], strides = [1, 1]} : vector<16x2xf32> to vector<16x1xf32>
    %9 = vector.extract_strided_slice %2 {offsets = [1, 0], sizes = [1, 32], strides = [1, 1]} : vector<2x32xf32> to vector<1x32xf32>
    %10 = vector.broadcast %8 : vector<16x1xf32> to vector<16x32xf32>
    %11 = vector.broadcast %9 : vector<1x32xf32> to vector<16x32xf32>
    %12 = arith.mulf %10, %11 : vector<16x32xf32>
    %13 = arith.addf %7, %12 : vector<16x32xf32>
    %c0_5 = arith.constant 0 : index
    %c0_6 = arith.constant 0 : index
    %14 = vector.load %arg4[%c0_5, %c0_6] : memref<1x32xf32, #tpu.memory_space<vmem>>, vector<1x32xf32>
    %15 = vector.broadcast %14 : vector<1x32xf32> to vector<16x32xf32>
    %16 = arith.addf %13, %15 : vector<16x32xf32>
    %17 = arith.addf %0, %16 : vector<16x32xf32>
    %cst = arith.constant dense<0.000000e+00> : vector<16xf32>
    %18 = vector.multi_reduction <add>, %17, %cst [1] : vector<16x32xf32> to vector<16xf32>
    %19 = vector.shape_cast %18 : vector<16xf32> to vector<16x1xf32>
    %cst_7 = arith.constant 3.200000e+01 : f32
    %20 = vector.broadcast %cst_7 : f32 to vector<16x1xf32>
    %21 = arith.divf %19, %20 : vector<16x1xf32>
    %22 = vector.broadcast %21 : vector<16x1xf32> to vector<16x32xf32>
    %23 = arith.subf %17, %22 : vector<16x32xf32>
    %24 = vector.broadcast %21 : vector<16x1xf32> to vector<16x32xf32>
    %25 = arith.subf %17, %24 : vector<16x32xf32>
    %26 = arith.mulf %23, %25 : vector<16x32xf32>
    %cst_8 = arith.constant dense<0.000000e+00> : vector<16xf32>
    %27 = vector.multi_reduction <add>, %26, %cst_8 [1] : vector<16x32xf32> to vector<16xf32>
    %28 = vector.shape_cast %27 : vector<16xf32> to vector<16x1xf32>
    %cst_9 = arith.constant 3.200000e+01 : f32
    %29 = vector.broadcast %cst_9 : f32 to vector<16x1xf32>
    %30 = arith.divf %28, %29 : vector<16x1xf32>
    %31 = vector.broadcast %21 : vector<16x1xf32> to vector<16x32xf32>
    %32 = arith.subf %17, %31 : vector<16x32xf32>
    %cst_10 = arith.constant 9.99999974E-6 : f32
    %33 = vector.broadcast %cst_10 : f32 to vector<16x1xf32>
    %34 = arith.addf %30, %33 : vector<16x1xf32>
    %35 = math.rsqrt %34 : vector<16x1xf32>
    %36 = vector.broadcast %35 : vector<16x1xf32> to vector<16x32xf32>
    %37 = arith.mulf %32, %36 : vector<16x32xf32>
    %c0_11 = arith.constant 0 : index
    %c0_12 = arith.constant 0 : index
    %38 = vector.load %arg5[%c0_11, %c0_12] : memref<1x32xf32, #tpu.memory_space<vmem>>, vector<1x32xf32>
    %39 = vector.broadcast %38 : vector<1x32xf32> to vector<16x32xf32>
    %40 = arith.mulf %37, %39 : vector<16x32xf32>
    %c0_13 = arith.constant 0 : index
    %c0_14 = arith.constant 0 : index
    %41 = vector.load %arg6[%c0_13, %c0_14] : memref<1x32xf32, #tpu.memory_space<vmem>>, vector<1x32xf32>
    %42 = vector.broadcast %41 : vector<1x32xf32> to vector<16x32xf32>
    %43 = arith.addf %40, %42 : vector<16x32xf32>
    %c0_15 = arith.constant 0 : index
    %c0_16 = arith.constant 0 : index
    %44 = vector.load %arg7[%c0_15, %c0_16] : memref<32x32xf32, #tpu.memory_space<vmem>>, vector<32x32xf32>
    %cst_17 = arith.constant dense<0.000000e+00> : vector<16x32xf32>
    %45 = tpu.matmul %43, %44, %cst_17 {dimension_numbers = #tpu.dot_dimension_numbers<[1], [0], [0], [1], [0, 0, 1, 1], [], []>} : vector<16x32xf32>, vector<32x32xf32>, vector<16x32xf32> -> vector<16x32xf32>
    %c0_18 = arith.constant 0 : index
    %c0_19 = arith.constant 0 : index
    %46 = vector.load %arg8[%c0_18, %c0_19] : memref<1x32xf32, #tpu.memory_space<vmem>>, vector<1x32xf32>
    %47 = vector.broadcast %46 : vector<1x32xf32> to vector<16x32xf32>
    %48 = arith.addf %45, %47 : vector<16x32xf32>
    %49 = arith.negf %48 : vector<16x32xf32>
    %50 = math.exp %49 : vector<16x32xf32>
    %cst_20 = arith.constant 1.000000e+00 : f32
    %51 = vector.broadcast %cst_20 : f32 to vector<16x32xf32>
    %52 = arith.addf %51, %50 : vector<16x32xf32>
    %53 = arith.divf %51, %52 : vector<16x32xf32>
    %54 = arith.mulf %48, %53 : vector<16x32xf32>
    %c0_21 = arith.constant 0 : index
    %c0_22 = arith.constant 0 : index
    %55 = vector.load %arg9[%c0_21, %c0_22] : memref<32x32xf32, #tpu.memory_space<vmem>>, vector<32x32xf32>
    %cst_23 = arith.constant dense<0.000000e+00> : vector<16x32xf32>
    %56 = tpu.matmul %43, %55, %cst_23 {dimension_numbers = #tpu.dot_dimension_numbers<[1], [0], [0], [1], [0, 0, 1, 1], [], []>} : vector<16x32xf32>, vector<32x32xf32>, vector<16x32xf32> -> vector<16x32xf32>
    %c0_24 = arith.constant 0 : index
    %c0_25 = arith.constant 0 : index
    %57 = vector.load %arg10[%c0_24, %c0_25] : memref<1x32xf32, #tpu.memory_space<vmem>>, vector<1x32xf32>
    %58 = vector.broadcast %57 : vector<1x32xf32> to vector<16x32xf32>
    %59 = arith.addf %56, %58 : vector<16x32xf32>
    %60 = arith.mulf %54, %59 : vector<16x32xf32>
    %c0_26 = arith.constant 0 : index
    %c0_27 = arith.constant 0 : index
    %61 = vector.load %arg11[%c0_26, %c0_27] : memref<32x128xf32, #tpu.memory_space<vmem>>, vector<32x128xf32>
    %cst_28 = arith.constant dense<0.000000e+00> : vector<16x128xf32>
    %62 = tpu.matmul %60, %61, %cst_28 {dimension_numbers = #tpu.dot_dimension_numbers<[1], [0], [0], [1], [0, 0, 1, 1], [], []>} : vector<16x32xf32>, vector<32x128xf32>, vector<16x128xf32> -> vector<16x128xf32>
    %c0_29 = arith.constant 0 : index
    %c0_30 = arith.constant 0 : index
    %63 = vector.load %arg12[%c0_29, %c0_30] : memref<1x128xf32, #tpu.memory_space<vmem>>, vector<1x128xf32>
    %64 = vector.broadcast %63 : vector<1x128xf32> to vector<16x128xf32>
    %65 = arith.addf %62, %64 : vector<16x128xf32>
    %c0_31 = arith.constant 0 : index
    %c0_32 = arith.constant 0 : index
    %66 = vector.load %arg13[%c0_31, %c0_32] : memref<16x128xf32, #tpu.memory_space<vmem>>, vector<16x128xf32>
    tpu.vector_store %arg13[%c0_31, %c0_32], %65 {strides = array<i32>} : memref<16x128xf32, #tpu.memory_space<vmem>>, vector<16x128xf32>,
    return
  }
  func.func @transform_0(%arg0: i32) -> (i32, i32) {
    %c0_i32 = arith.constant 0 : i32
    %c0_i32_0 = arith.constant 0 : i32
    return %arg0, %c0_i32 : i32, i32
  }
  func.func @transform_1(%arg0: i32) -> (i32, i32) {
    %c0_i32 = arith.constant 0 : i32
    %c0_i32_0 = arith.constant 0 : i32
    return %arg0, %c0_i32 : i32, i32
  }
  func.func @transform_2(%arg0: i32) -> (i32, i32) {
    %c0_i32 = arith.constant 0 : i32
    %c0_i32_0 = arith.constant 0 : i32
    %c0_i32_1 = arith.constant 0 : i32
    return %c0_i32, %c0_i32_0 : i32, i32
  }
  func.func @transform_3(%arg0: i32) -> (i32, i32) {
    %c0_i32 = arith.constant 0 : i32
    %c0_i32_0 = arith.constant 0 : i32
    %c0_i32_1 = arith.constant 0 : i32
    return %c0_i32, %c0_i32_0 : i32, i32
  }
  func.func @transform_4(%arg0: i32) -> (i32, i32) {
    %c0_i32 = arith.constant 0 : i32
    %c0_i32_0 = arith.constant 0 : i32
    %c0_i32_1 = arith.constant 0 : i32
    return %c0_i32, %c0_i32_0 : i32, i32
  }
  func.func @transform_5(%arg0: i32) -> (i32, i32) {
    %c0_i32 = arith.constant 0 : i32
    %c0_i32_0 = arith.constant 0 : i32
    %c0_i32_1 = arith.constant 0 : i32
    return %c0_i32, %c0_i32_0 : i32, i32
  }
  func.func @transform_6(%arg0: i32) -> (i32, i32) {
    %c0_i32 = arith.constant 0 : i32
    %c0_i32_0 = arith.constant 0 : i32
    %c0_i32_1 = arith.constant 0 : i32
    return %c0_i32, %c0_i32_0 : i32, i32
  }
  func.func @transform_7(%arg0: i32) -> (i32, i32) {
    %c0_i32 = arith.constant 0 : i32
    %c0_i32_0 = arith.constant 0 : i32
    %c0_i32_1 = arith.constant 0 : i32
    return %c0_i32, %c0_i32_0 : i32, i32
  }
  func.func @transform_8(%arg0: i32) -> (i32, i32) {
    %c0_i32 = arith.constant 0 : i32
    %c0_i32_0 = arith.constant 0 : i32
    %c0_i32_1 = arith.constant 0 : i32
    return %c0_i32, %c0_i32_0 : i32, i32
  }
  func.func @transform_9(%arg0: i32) -> (i32, i32) {
    %c0_i32 = arith.constant 0 : i32
    %c0_i32_0 = arith.constant 0 : i32
    %c0_i32_1 = arith.constant 0 : i32
    return %c0_i32, %c0_i32_0 : i32, i32
  }
  func.func @transform_10(%arg0: i32) -> (i32, i32) {
    %c0_i32 = arith.constant 0 : i32
    %c0_i32_0 = arith.constant 0 : i32
    %c0_i32_1 = arith.constant 0 : i32
    return %c0_i32, %c0_i32_0 : i32, i32
  }
  func.func @transform_11(%arg0: i32) -> (i32, i32) {
    %c0_i32 = arith.constant 0 : i32
    %c0_i32_0 = arith.constant 0 : i32
    %c0_i32_1 = arith.constant 0 : i32
    return %c0_i32, %c0_i32_0 : i32, i32
  }
  func.func @transform_12(%arg0: i32) -> (i32, i32) {
    %c0_i32 = arith.constant 0 : i32
    %c0_i32_0 = arith.constant 0 : i32
    return %arg0, %c0_i32 : i32, i32
  }
}

</mosaic_0001>

<llo_original>
// kernel: tpu_custom_call.1
$region0: #{tpu_custom_call.1}
  #allocation0 [shape = 'u32[]', space=smem, size = 0x4, offset = 0x4, fixed_abs, tag = 'smem constant byte address 0x4 - core index']
  #allocation1 [shape = 'u32[144,128]{1,0:T(1,128)}', space=vmem, size = 0x12000, scoped, tag = 'internal scratch']
  %s0 = inlined_call_operand.hbm [shape: f32[16,32], index: 0, kind: input, shape index: {}]
  %s1 = inlined_call_operand.vmem [shape: f32[16,2], index: 1, kind: input, shape index: {}]
  %s2 = inlined_call_operand.hbm [shape: f32[2,32], index: 2, kind: input, shape index: {}]
  %s3 = inlined_call_operand.hbm [shape: f32[1,32], index: 3, kind: input, shape index: {}]
  %s4 = inlined_call_operand.hbm [shape: f32[1,32], index: 4, kind: input, shape index: {}]
  %s5 = inlined_call_operand.hbm [shape: f32[1,32], index: 5, kind: input, shape index: {}]
  %s6 = inlined_call_operand.hbm [shape: f32[32,32], index: 6, kind: input, shape index: {}]
  %s7 = inlined_call_operand.hbm [shape: f32[1,32], index: 7, kind: input, shape index: {}]
  %s8 = inlined_call_operand.vmem [shape: f32[32,32], index: 8, kind: input, shape index: {}]
  %s9 = inlined_call_operand.vmem [shape: f32[1,32], index: 9, kind: input, shape index: {}]
  %s10 = inlined_call_operand.hbm [shape: f32[32,128], index: 10, kind: input, shape index: {}]
  %s11 = inlined_call_operand.vmem [shape: f32[1,128], index: 11, kind: input, shape index: {}]
  %s12 = inlined_call_operand.hbm [shape: f32[16,128], index: 12, kind: output, shape index: {}]
  %s13 = sld [smem:[#allocation0]]
  $region90: #{tpu_custom_call.1} parent=0
    _
  %s15 = ssub.s32 1, %s13
  %s16 = scalar_select 0, %s15, %s13
  $region1: #{tpu_custom_call.1} parent=0
    #allocation2 [shape = 'u8[8192]{0}', space=vmem, size = 0x2000, scoped, tag = 'input window, operand 0, single buffered']
    #allocation3 [shape = 's32[1]{0}', space=sflag, size = 0x4, scoped, tag = 'scoped memory for tpu_custom_call.1']
    #allocation4 [shape = 's32[1]{0}', space=sflag, size = 0x4, scoped, tag = 'scoped memory for tpu_custom_call.1']
    #allocation5 [shape = 'u8[1024]{0}', space=vmem, size = 0x400, scoped, tag = 'input window, operand 2, single buffered']
    #allocation6 [shape = 's32[1]{0}', space=sflag, size = 0x4, scoped, tag = 'scoped memory for tpu_custom_call.1']
    #allocation7 [shape = 'u8[512]{0}', space=vmem, size = 0x400, scoped, tag = 'input window, operand 3, single buffered']
    #allocation8 [shape = 'u8[512]{0}', space=vmem, size = 0x400, scoped, tag = 'input window, operand 4, single buffered']
    #allocation9 [shape = 's32[1]{0}', space=sflag, size = 0x4, scoped, tag = 'scoped memory for tpu_custom_call.1']
    #allocation10 [shape = 'u8[512]{0}', space=vmem, size = 0x400, scoped, tag = 'input window, operand 5, single buffered']
    #allocation11 [shape = 'u8[16384]{0}', space=vmem, size = 0x4000, scoped, tag = 'input window, operand 6, single buffered']
    #allocation12 [shape = 's32[1]{0}', space=sflag, size = 0x4, scoped, tag = 'scoped memory for tpu_custom_call.1']
    #allocation13 [shape = 'u8[512]{0}', space=vmem, size = 0x400, scoped, tag = 'input window, operand 7, single buffered']
    #allocation14 [shape = 'u8[16384]{0}', space=vmem, size = 0x4000, scoped, tag = 'input window, operand 10, single buffered']
    #allocation15 [shape = 's32[1]{0}', space=sflag, size = 0x4, scoped, tag = 'scoped memory for tpu_custom_call.1']
    #allocation16 [shape = 'u8[8192]{0}', space=vmem, size = 0x2000, scoped, tag = 'output window, operand 0, single buffered']
    %17 = vsyncpa [#allocation3], 0
    %18 = vsyncpa [#allocation6], 0
    %19 = vsyncpa [#allocation9], 0
    %20 = vsyncpa [#allocation12], 0
    %21 = vsyncpa [#allocation15], 0
    %22 = vsyncpa [#allocation4], 0
    // Predicated region
    $region2: #{tpu_custom_call.1} parent=1 // pred_check
      _
    $region3: #{tpu_custom_call.1} parent=1 // pred_check_branch
      %24 = sbr.rel (0) target = $region5
    $region4: #{tpu_custom_call.1} parent=1 // pred_region
      %s26 = ssub.s32 256, 256
      %27 = vsyncadd [#allocation3], %s26
      %s28 = sshll.u32 [#allocation2], 4
      %s29 = int_to_ptr.vmem [resolvable:$true] %s28
      %34 = dma.hbm_to_vmem [thread:$0]  %s0, 256, %s29, [#allocation3], 128, 128, 8
    $region5: #{tpu_custom_call.1} parent=1 // pred_fallthru
      _
    // Predicated region
    $region6: #{tpu_custom_call.1} parent=1 // pred_check
      _
    $region7: #{tpu_custom_call.1} parent=1 // pred_check_branch
      %36 = sbr.rel (0) target = $region9
    $region8: #{tpu_custom_call.1} parent=1 // pred_region
      _
    $region9: #{tpu_custom_call.1} parent=1 // pred_fallthru
      _
    // Predicated region
    $region10: #{tpu_custom_call.1} parent=1 // pred_check
      _
    $region11: #{tpu_custom_call.1} parent=1 // pred_check_branch
      %38 = sbr.rel (0) target = $region13
    $region12: #{tpu_custom_call.1} parent=1 // pred_region
      %s40 = ssub.s32 32, 32
      %41 = vsyncadd [#allocation6], %s40
      %s43 = sshll.u32 [#allocation5], 4
      %s44 = int_to_ptr.vmem [resolvable:$true] %s43
      %46 = dma.hbm_to_vmem [thread:$0]  %s2, 32, %s44, [#allocation6]
    $region13: #{tpu_custom_call.1} parent=1 // pred_fallthru
      _
    // Predicated region
    $region14: #{tpu_custom_call.1} parent=1 // pred_check
      _
    $region15: #{tpu_custom_call.1} parent=1 // pred_check_branch
      %48 = sbr.rel (0) target = $region17
    $region16: #{tpu_custom_call.1} parent=1 // pred_region
      %s50 = ssub.s32 16, 16
      %51 = vsyncadd [#allocation6], %s50
      %s53 = sshll.u32 [#allocation7], 4
      %s54 = int_to_ptr.vmem [resolvable:$true] %s53
      %56 = dma.hbm_to_vmem [thread:$0]  %s3, 16, %s54, [#allocation6]
    $region17: #{tpu_custom_call.1} parent=1 // pred_fallthru
      _
    // Predicated region
    $region18: #{tpu_custom_call.1} parent=1 // pred_check
      _
    $region19: #{tpu_custom_call.1} parent=1 // pred_check_branch
      %58 = sbr.rel (0) target = $region21
    $region20: #{tpu_custom_call.1} parent=1 // pred_region
      %s60 = ssub.s32 16, 16
      %61 = vsyncadd [#allocation9], %s60
      %s63 = sshll.u32 [#allocation8], 4
      %s64 = int_to_ptr.vmem [resolvable:$true] %s63
      %66 = dma.hbm_to_vmem [thread:$0]  %s4, 16, %s64, [#allocation9]
    $region21: #{tpu_custom_call.1} parent=1 // pred_fallthru
      _
    // Predicated region
    $region22: #{tpu_custom_call.1} parent=1 // pred_check
      _
    $region23: #{tpu_custom_call.1} parent=1 // pred_check_branch
      %68 = sbr.rel (0) target = $region25
    $region24: #{tpu_custom_call.1} parent=1 // pred_region
      %s70 = ssub.s32 16, 16
      %71 = vsyncadd [#allocation9], %s70
      %s73 = sshll.u32 [#allocation10], 4
      %s74 = int_to_ptr.vmem [resolvable:$true] %s73
      %76 = dma.hbm_to_vmem [thread:$0]  %s5, 16, %s74, [#allocation9]
    $region25: #{tpu_custom_call.1} parent=1 // pred_fallthru
      _
    // Predicated region
    $region26: #{tpu_custom_call.1} parent=1 // pred_check
      _
    $region27: #{tpu_custom_call.1} parent=1 // pred_check_branch
      %78 = sbr.rel (0) target = $region29
    $region28: #{tpu_custom_call.1} parent=1 // pred_region
      %s80 = ssub.s32 512, 512
      %81 = vsyncadd [#allocation12], %s80
      %s82 = sshll.u32 [#allocation11], 4
      %s83 = int_to_ptr.vmem [resolvable:$true] %s82
      %88 = dma.hbm_to_vmem [thread:$0]  %s6, 512, %s83, [#allocation12], 128, 128, 8
    $region29: #{tpu_custom_call.1} parent=1 // pred_fallthru
      _
    // Predicated region
    $region30: #{tpu_custom_call.1} parent=1 // pred_check
      _
    $region31: #{tpu_custom_call.1} parent=1 // pred_check_branch
      %90 = sbr.rel (0) target = $region33
    $region32: #{tpu_custom_call.1} parent=1 // pred_region
      %s92 = ssub.s32 16, 16
      %93 = vsyncadd [#allocation12], %s92
      %s95 = sshll.u32 [#allocation13], 4
      %s96 = int_to_ptr.vmem [resolvable:$true] %s95
      %98 = dma.hbm_to_vmem [thread:$0]  %s7, 16, %s96, [#allocation12]
    $region33: #{tpu_custom_call.1} parent=1 // pred_fallthru
      _
    // Predicated region
    $region34: #{tpu_custom_call.1} parent=1 // pred_check
      _
    $region35: #{tpu_custom_call.1} parent=1 // pred_check_branch
      %100 = sbr.rel (0) target = $region37
    $region36: #{tpu_custom_call.1} parent=1 // pred_region
      _
    $region37: #{tpu_custom_call.1} parent=1 // pred_fallthru
      _
    // Predicated region
    $region38: #{tpu_custom_call.1} parent=1 // pred_check
      _
    $region39: #{tpu_custom_call.1} parent=1 // pred_check_branch
      %102 = sbr.rel (0) target = $region41
    $region40: #{tpu_custom_call.1} parent=1 // pred_region
      _
    $region41: #{tpu_custom_call.1} parent=1 // pred_fallthru
      _
    // Predicated region
    $region42: #{tpu_custom_call.1} parent=1 // pred_check
      _
    $region43: #{tpu_custom_call.1} parent=1 // pred_check_branch
      %104 = sbr.rel (0) target = $region45
    $region44: #{tpu_custom_call.1} parent=1 // pred_region
      %s106 = ssub.s32 512, 512
      %107 = vsyncadd [#allocation15], %s106
      %s108 = sshll.u32 [#allocation14], 4
      %s109 = int_to_ptr.vmem [resolvable:$true] %s108
      %114 = dma.hbm_to_vmem [thread:$0]  %s10, 512, %s109, [#allocation15], 128, 128, 8
    $region45: #{tpu_custom_call.1} parent=1 // pred_fallthru
      _
    // Predicated region
    $region46: #{tpu_custom_call.1} parent=1 // pred_check
      _
    $region47: #{tpu_custom_call.1} parent=1 // pred_check_branch
      %116 = sbr.rel (0) target = $region49
    $region48: #{tpu_custom_call.1} parent=1 // pred_region
      _
    $region49: #{tpu_custom_call.1} parent=1 // pred_fallthru
      _
    // Predicated region
    $region50: #{tpu_custom_call.1} parent=1 // pred_check
      _
    $region51: #{tpu_custom_call.1} parent=1 // pred_check_branch
      %118 = sbr.rel (0) target = $region53
    $region52: #{tpu_custom_call.1} parent=1 // pred_region
      %119 = dma.done [#allocation3], 256
    $region53: #{tpu_custom_call.1} parent=1 // pred_fallthru
      _
    // Predicated region
    $region54: #{tpu_custom_call.1} parent=1 // pred_check
      _
    $region55: #{tpu_custom_call.1} parent=1 // pred_check_branch
      %121 = sbr.rel (0) target = $region57
    $region56: #{tpu_custom_call.1} parent=1 // pred_region
      %122 = dma.done [#allocation6], 32
    $region57: #{tpu_custom_call.1} parent=1 // pred_fallthru
      _
    // Predicated region
    $region58: #{tpu_custom_call.1} parent=1 // pred_check
      _
    $region59: #{tpu_custom_call.1} parent=1 // pred_check_branch
      %124 = sbr.rel (0) target = $region61
    $region60: #{tpu_custom_call.1} parent=1 // pred_region
      %125 = dma.done [#allocation6], 16
    $region61: #{tpu_custom_call.1} parent=1 // pred_fallthru
      _
    // Predicated region
    $region62: #{tpu_custom_call.1} parent=1 // pred_check
      _
    $region63: #{tpu_custom_call.1} parent=1 // pred_check_branch
      %127 = sbr.rel (0) target = $region65
    $region64: #{tpu_custom_call.1} parent=1 // pred_region
      %128 = dma.done [#allocation9], 16
    $region65: #{tpu_custom_call.1} parent=1 // pred_fallthru
      _
    // Predicated region
    $region66: #{tpu_custom_call.1} parent=1 // pred_check
      _
    $region67: #{tpu_custom_call.1} parent=1 // pred_check_branch
      %130 = sbr.rel (0) target = $region69
    $region68: #{tpu_custom_call.1} parent=1 // pred_region
      %131 = dma.done [#allocation9], 16
    $region69: #{tpu_custom_call.1} parent=1 // pred_fallthru
      _
    // Predicated region
    $region70: #{tpu_custom_call.1} parent=1 // pred_check
      _
    $region71: #{tpu_custom_call.1} parent=1 // pred_check_branch
      %133 = sbr.rel (0) target = $region73
    $region72: #{tpu_custom_call.1} parent=1 // pred_region
      %134 = dma.done [#allocation12], 512
    $region73: #{tpu_custom_call.1} parent=1 // pred_fallthru
      _
    // Predicated region
    $region74: #{tpu_custom_call.1} parent=1 // pred_check
      _
    $region75: #{tpu_custom_call.1} parent=1 // pred_check_branch
      %136 = sbr.rel (0) target = $region77
    $region76: #{tpu_custom_call.1} parent=1 // pred_region
      %137 = dma.done [#allocation12], 16
    $region77: #{tpu_custom_call.1} parent=1 // pred_fallthru
      _
    // Predicated region
    $region78: #{tpu_custom_call.1} parent=1 // pred_check
      _
    $region79: #{tpu_custom_call.1} parent=1 // pred_check_branch
      %139 = sbr.rel (0) target = $region81
    $region80: #{tpu_custom_call.1} parent=1 // pred_region
      %140 = dma.done [#allocation15], 512
    $region81: #{tpu_custom_call.1} parent=1 // pred_fallthru
      _
    %v141 = vld [vmem:[#allocation2] sm:$0xff]
    %v142 = vld [vmem:[#allocation2 + $0x8] sm:$0xff]
    %v143 = vld [vmem:[%s1] sm:$0xff]
    %v144 = vld [vmem:[%s1 + $0x8] sm:$0xff]
    %v145 = vld [vmem:[#allocation5] sm:$0x3]
    %147 = vset.pattern.permute.xlu0 0
    %148 = vperm.xlu0 %147, %v143
    %v149 = vpop.permute.xlu0 %148
    %152 = vset.pattern.permute.xlu0 0
    %153 = vperm.xlu0 %152, %v144
    %v154 = vpop.permute.xlu0 %153
    %v156 = vlaneseq
    %v157 = vshrl.u32 %v156, 7
    %v158 = vsub.s32 0, %v157
    %v159 = vrot.slane %v145, %v158
    %v160 = vmul.f32 %v149, %v159
    %v161 = vmul.f32 %v154, %v159
    %162 = vset.pattern.permute.xlu0 1
    %163 = vperm.xlu0 %162, %v143
    %v164 = vpop.permute.xlu0 %163
    %166 = vset.pattern.permute.xlu0 1
    %167 = vperm.xlu0 %166, %v144
    %v168 = vpop.permute.xlu0 %167
    %v170 = vlaneseq
    %v171 = vshrl.u32 %v170, 7
    %v172 = vsub.s32 1, %v171
    %v173 = vrot.slane %v145, %v172
    %v174 = vmul.f32 %v164, %v173
    %v175 = vmul.f32 %v168, %v173
    %v176 = vadd.f32 %v160, %v174
    %v177 = vadd.f32 %v161, %v175
    %v178 = vld [vmem:[#allocation7] sm:$0x1]
    %v180 = vlaneseq
    %v181 = vshrl.u32 %v180, 7
    %v182 = vsub.s32 0, %v181
    %v183 = vrot.slane %v178, %v182
    %v185 = vadd.f32 %v176, %v183
    %v186 = vadd.f32 %v177, %v183
    %v187 = vadd.f32 %v141, %v185
    %v188 = vadd.f32 %v142, %v186
    %vm189 = vcmask 261120
    %v190 = vsel %vm189, %v187, 0.0
    %191 = vadd.xlane.f32.xlu0 %v190
    %v192 = vpop.xlane.xlu0 %191
    %v193 = vsel %vm189, %v188, 0.0
    %194 = vadd.xlane.f32.xlu0 %v193
    %v195 = vpop.xlane.xlu0 %194
    %v196 = vrcp.pop 32.0
    %v197 = vmul.f32 %v192, %v196
    %v198 = vmul.f32 %v195, %v196
    %v199 = vsub.f32 %v187, %v197
    %v200 = vsub.f32 %v188, %v198
    %v201 = vmul.f32 %v199, %v199
    %v202 = vmul.f32 %v200, %v200
    %v203 = vsel %vm189, %v201, 0.0
    %204 = vadd.xlane.f32.xlu0 %v203
    %v205 = vpop.xlane.xlu0 %204
    %v206 = vsel %vm189, %v202, 0.0
    %207 = vadd.xlane.f32.xlu0 %v206
    %v208 = vpop.xlane.xlu0 %207
    %v209 = vmul.f32 %v205, %v196
    %v210 = vmul.f32 %v208, %v196
    %v211 = vadd.f32 %v209, 1e-05
    %v212 = vadd.f32 %v210, 1e-05
    %v213 = vrsqrt.pop %v211
    %v214 = vrsqrt.pop %v212
    %v215 = vmul.f32 %v199, %v213
    %v216 = vmul.f32 %v200, %v214
    %v217 = vld [vmem:[#allocation8] sm:$0x1]
    %v219 = vlaneseq
    %v220 = vshrl.u32 %v219, 7
    %v221 = vsub.s32 0, %v220
    %v222 = vrot.slane %v217, %v221
    %v224 = vmul.f32 %v215, %v222
    %v225 = vmul.f32 %v216, %v222
    %v226 = vld [vmem:[#allocation10] sm:$0x1]
    %v228 = vlaneseq
    %v229 = vshrl.u32 %v228, 7
    %v230 = vsub.s32 0, %v229
    %v231 = vrot.slane %v226, %v230
    %v233 = vadd.f32 %v224, %v231
    %v234 = vadd.f32 %v225, %v231
    %v235 = vld [vmem:[#allocation11] sm:$0xff]
    %v236 = vld [vmem:[#allocation11 + $0x8] sm:$0xff]
    %v237 = vld [vmem:[#allocation11 + $0x10] sm:$0xff]
    %v238 = vld [vmem:[#allocation11 + $0x18] sm:$0xff]
    %v239 = vld [vmem:[#allocation13] sm:$0x1]
    %v241 = vlaneseq
    %v242 = vshrl.u32 %v241, 7
    %v243 = vsub.s32 0, %v242
    %v244 = vrot.slane %v239, %v243
    %v247 = vsel %vm189, %v233, 0
    %v250 = vsel %vm189, %v234, 0
    %252 = vmatprep.subr.mxu0 0.0
    %253 = vmatpush1.msra.mxu0 0.0
    %254 = vmatprep.subr.mxu0 0.0
    %255 = vmatpush1.msra.mxu0 0.0
    %256 = vmatprep.subr.mxu0 0.0
    %257 = vmatpush1.msra.mxu0 0.0
    %258 = vmatprep.subr.mxu0 0.0
    %259 = vmatpush1.msra.mxu0 0.0
    %260 = vmatprep.subr.mxu0 0.0
    %261 = vmatpush1.msra.mxu0 0.0
    %262 = vmatprep.subr.mxu0 0.0
    %263 = vmatpush1.msra.mxu0 0.0
    %264 = vmatprep.subr.mxu0 0.0
    %265 = vmatpush1.msra.mxu0 0.0
    %266 = vmatprep.subr.mxu0 0.0
    %267 = vmatpush1.msra.mxu0 0.0
    %268 = vmatprep.subr.mxu0 0.0
    %269 = vmatpush1.msra.mxu0 0.0
    %270 = vmatprep.subr.mxu0 0.0
    %271 = vmatpush1.msra.mxu0 0.0
    %272 = vmatprep.subr.mxu0 0.0
    %273 = vmatpush1.msra.mxu0 0.0
    %274 = vmatprep.subr.mxu0 0.0
    %275 = vmatpush1.msra.mxu0 0.0
    %276 = vmatprep.subr.mxu0 0.0
    %277 = vmatpush1.msra.mxu0 %v238
    %278 = vmatprep.subr.mxu0 0.0
    %279 = vmatpush1.msra.mxu0 %v237
    %280 = vmatprep.subr.mxu0 0.0
    %281 = vmatpush1.msra.mxu0 %v236
    %282 = vmatprep.subr.mxu0 0.0
    %283 = vmatpush1.msra.mxu0 %v235
    %284 = vmatprep.subr.mxu0 0.0
    %285 = vmatpush2.msra.mxu0 0.0
    %286 = vmatprep.subr.mxu0 0.0
    %287 = vmatpush2.msra.mxu0 0.0
    %288 = vmatprep.subr.mxu0 0.0
    %289 = vmatpush2.msra.mxu0 0.0
    %290 = vmatprep.subr.mxu0 0.0
    %291 = vmatpush2.msra.mxu0 0.0
    %292 = vmatprep.subr.mxu0 0.0
    %293 = vmatpush2.msra.mxu0 0.0
    %294 = vmatprep.subr.mxu0 0.0
    %295 = vmatpush2.msra.mxu0 0.0
    %296 = vmatprep.subr.mxu0 0.0
    %297 = vmatpush2.msra.mxu0 0.0
    %298 = vmatprep.subr.mxu0 0.0
    %299 = vmatpush2.msra.mxu0 0.0
    %300 = vmatprep.subr.mxu0 0.0
    %301 = vmatpush2.msra.mxu0 0.0
    %302 = vmatprep.subr.mxu0 0.0
    %303 = vmatpush2.msra.mxu0 0.0
    %304 = vmatprep.subr.mxu0 0.0
    %305 = vmatpush2.msra.mxu0 0.0
    %306 = vmatprep.subr.mxu0 0.0
    %307 = vmatpush2.msra.mxu0 0.0
    %308 = vmatprep.subr.mxu0 0.0
    %309 = vmatpush2.msra.mxu0 0.0
    %310 = vmatprep.subr.mxu0 0.0
    %311 = vmatpush2.msra.mxu0 0.0
    %312 = vmatprep.subr.mxu0 0.0
    %313 = vmatpush2.msra.mxu0 0.0
    %314 = vmatprep.subr.mxu0 0.0
    %315 = vmatpush2.msra.mxu0 0.0
    %316 = vmatprep.mubr.f32.mxu0 0.0
    %317 = vmatmul.mubr.f32.gmra.mxu0 %v247
    %v318 = vpop.f32.mrf.mxu0
    %v319 = vadd.f32 %v244, %v318
    %v320 = vpop.f32.mrf.mxu0
    %321 = vmatprep.mubr.f32.mxu0 0.0
    %322 = vmatmul.mubr.f32.gmra.mxu0 %v250
    %v323 = vpop.f32.mrf.mxu0
    %v324 = vadd.f32 %v244, %v323
    %v325 = vpop.f32.mrf.mxu0
    %326 = vdwg.mxu0
    %v327 = vxor.u32 %v319, 2147483648
    %v328 = vxor.u32 %v324, 2147483648
    %v329 = vmul.f32 %v327, 1.442695
    %v330 = vpow.pop %v329
    %v331 = vmul.f32 %v328, 1.442695
    %v332 = vpow.pop %v331
    %v333 = vadd.f32 %v330, 1.0
    %v334 = vadd.f32 %v332, 1.0
    %v335 = vrcp.pop %v333
    %v336 = vmul.f32 1.0, %v335
    %v337 = vrcp.pop %v334
    %v338 = vmul.f32 1.0, %v337
    %v339 = vmul.f32 %v319, %v336
    %v340 = vmul.f32 %v324, %v338
    %v341 = vld [vmem:[%s8] sm:$0xff]
    %v342 = vld [vmem:[%s8 + $0x8] sm:$0xff]
    %v343 = vld [vmem:[%s8 + $0x10] sm:$0xff]
    %v344 = vld [vmem:[%s8 + $0x18] sm:$0xff]
    %v345 = vld [vmem:[%s9] sm:$0x1]
    %v347 = vlaneseq
    %v348 = vshrl.u32 %v347, 7
    %v349 = vsub.s32 0, %v348
    %v350 = vrot.slane %v345, %v349
    %352 = vmatprep.subr.mxu0 0.0
    %353 = vmatpush1.msra.mxu0 0.0
    %354 = vmatprep.subr.mxu0 0.0
    %355 = vmatpush1.msra.mxu0 0.0
    %356 = vmatprep.subr.mxu0 0.0
    %357 = vmatpush1.msra.mxu0 0.0
    %358 = vmatprep.subr.mxu0 0.0
    %359 = vmatpush1.msra.mxu0 0.0
    %360 = vmatprep.subr.mxu0 0.0
    %361 = vmatpush1.msra.mxu0 0.0
    %362 = vmatprep.subr.mxu0 0.0
    %363 = vmatpush1.msra.mxu0 0.0
    %364 = vmatprep.subr.mxu0 0.0
    %365 = vmatpush1.msra.mxu0 0.0
    %366 = vmatprep.subr.mxu0 0.0
    %367 = vmatpush1.msra.mxu0 0.0
    %368 = vmatprep.subr.mxu0 0.0
    %369 = vmatpush1.msra.mxu0 0.0
    %370 = vmatprep.subr.mxu0 0.0
    %371 = vmatpush1.msra.mxu0 0.0
    %372 = vmatprep.subr.mxu0 0.0
    %373 = vmatpush1.msra.mxu0 0.0
    %374 = vmatprep.subr.mxu0 0.0
    %375 = vmatpush1.msra.mxu0 0.0
    %376 = vmatprep.subr.mxu0 0.0
    %377 = vmatpush1.msra.mxu0 %v344
    %378 = vmatprep.subr.mxu0 0.0
    %379 = vmatpush1.msra.mxu0 %v343
    %380 = vmatprep.subr.mxu0 0.0
    %381 = vmatpush1.msra.mxu0 %v342
    %382 = vmatprep.subr.mxu0 0.0
    %383 = vmatpush1.msra.mxu0 %v341
    %384 = vmatprep.subr.mxu0 0.0
    %385 = vmatpush2.msra.mxu0 0.0
    %386 = vmatprep.subr.mxu0 0.0
    %387 = vmatpush2.msra.mxu0 0.0
    %388 = vmatprep.subr.mxu0 0.0
    %389 = vmatpush2.msra.mxu0 0.0
    %390 = vmatprep.subr.mxu0 0.0
    %391 = vmatpush2.msra.mxu0 0.0
    %392 = vmatprep.subr.mxu0 0.0
    %393 = vmatpush2.msra.mxu0 0.0
    %394 = vmatprep.subr.mxu0 0.0
    %395 = vmatpush2.msra.mxu0 0.0
    %396 = vmatprep.subr.mxu0 0.0
    %397 = vmatpush2.msra.mxu0 0.0
    %398 = vmatprep.subr.mxu0 0.0
    %399 = vmatpush2.msra.mxu0 0.0
    %400 = vmatprep.subr.mxu0 0.0
    %401 = vmatpush2.msra.mxu0 0.0
    %402 = vmatprep.subr.mxu0 0.0
    %403 = vmatpush2.msra.mxu0 0.0
    %404 = vmatprep.subr.mxu0 0.0
    %405 = vmatpush2.msra.mxu0 0.0
    %406 = vmatprep.subr.mxu0 0.0
    %407 = vmatpush2.msra.mxu0 0.0
    %408 = vmatprep.subr.mxu0 0.0
    %409 = vmatpush2.msra.mxu0 0.0
    %410 = vmatprep.subr.mxu0 0.0
    %411 = vmatpush2.msra.mxu0 0.0
    %412 = vmatprep.subr.mxu0 0.0
    %413 = vmatpush2.msra.mxu0 0.0
    %414 = vmatprep.subr.mxu0 0.0
    %415 = vmatpush2.msra.mxu0 0.0
    %416 = vmatprep.mubr.f32.mxu0 0.0
    %417 = vmatmul.mubr.f32.gmra.mxu0 %v247
    %v418 = vpop.f32.mrf.mxu0
    %v419 = vadd.f32 %v350, %v418
    %v420 = vpop.f32.mrf.mxu0
    %421 = vmatprep.mubr.f32.mxu0 0.0
    %422 = vmatmul.mubr.f32.gmra.mxu0 %v250
    %v423 = vpop.f32.mrf.mxu0
    %v424 = vadd.f32 %v350, %v423
    %v425 = vpop.f32.mrf.mxu0
    %426 = vdwg.mxu0
    %v427 = vmul.f32 %v339, %v419
    %v428 = vmul.f32 %v340, %v424
    %v429 = vld [vmem:[#allocation14] sm:$0xff]
    %v430 = vld [vmem:[#allocation14 + $0x8] sm:$0xff]
    %v431 = vld [vmem:[#allocation14 + $0x10] sm:$0xff]
    %v432 = vld [vmem:[#allocation14 + $0x18] sm:$0xff]
    %v433 = vld [vmem:[%s11] sm:$0x1]
    %v435 = vlaneseq
    %v436 = vshrl.u32 %v435, 7
    %v437 = vsub.s32 0, %v436
    %v438 = vrot.slane %v433, %v437
    %v441 = vsel %vm189, %v427, 0
    %v444 = vsel %vm189, %v428, 0
    %446 = vmatprep.subr.mxu0 0.0
    %447 = vmatpush1.msra.mxu0 0.0
    %448 = vmatprep.subr.mxu0 0.0
    %449 = vmatpush1.msra.mxu0 0.0
    %450 = vmatprep.subr.mxu0 0.0
    %451 = vmatpush1.msra.mxu0 0.0
    %452 = vmatprep.subr.mxu0 0.0
    %453 = vmatpush1.msra.mxu0 0.0
    %454 = vmatprep.subr.mxu0 0.0
    %455 = vmatpush1.msra.mxu0 0.0
    %456 = vmatprep.subr.mxu0 0.0
    %457 = vmatpush1.msra.mxu0 0.0
    %458 = vmatprep.subr.mxu0 0.0
    %459 = vmatpush1.msra.mxu0 0.0
    %460 = vmatprep.subr.mxu0 0.0
    %461 = vmatpush1.msra.mxu0 0.0
    %462 = vmatprep.subr.mxu0 0.0
    %463 = vmatpush1.msra.mxu0 0.0
    %464 = vmatprep.subr.mxu0 0.0
    %465 = vmatpush1.msra.mxu0 0.0
    %466 = vmatprep.subr.mxu0 0.0
    %467 = vmatpush1.msra.mxu0 0.0
    %468 = vmatprep.subr.mxu0 0.0
    %469 = vmatpush1.msra.mxu0 0.0
    %470 = vmatprep.subr.mxu0 0.0
    %471 = vmatpush1.msra.mxu0 %v432
    %472 = vmatprep.subr.mxu0 0.0
    %473 = vmatpush1.msra.mxu0 %v431
    %474 = vmatprep.subr.mxu0 0.0
    %475 = vmatpush1.msra.mxu0 %v430
    %476 = vmatprep.subr.mxu0 0.0
    %477 = vmatpush1.msra.mxu0 %v429
    %478 = vmatprep.subr.mxu0 0.0
    %479 = vmatpush2.msra.mxu0 0.0
    %480 = vmatprep.subr.mxu0 0.0
    %481 = vmatpush2.msra.mxu0 0.0
    %482 = vmatprep.subr.mxu0 0.0
    %483 = vmatpush2.msra.mxu0 0.0
    %484 = vmatprep.subr.mxu0 0.0
    %485 = vmatpush2.msra.mxu0 0.0
    %486 = vmatprep.subr.mxu0 0.0
    %487 = vmatpush2.msra.mxu0 0.0
    %488 = vmatprep.subr.mxu0 0.0
    %489 = vmatpush2.msra.mxu0 0.0
    %490 = vmatprep.subr.mxu0 0.0
    %491 = vmatpush2.msra.mxu0 0.0
    %492 = vmatprep.subr.mxu0 0.0
    %493 = vmatpush2.msra.mxu0 0.0
    %494 = vmatprep.subr.mxu0 0.0
    %495 = vmatpush2.msra.mxu0 0.0
    %496 = vmatprep.subr.mxu0 0.0
    %497 = vmatpush2.msra.mxu0 0.0
    %498 = vmatprep.subr.mxu0 0.0
    %499 = vmatpush2.msra.mxu0 0.0
    %500 = vmatprep.subr.mxu0 0.0
    %501 = vmatpush2.msra.mxu0 0.0
    %502 = vmatprep.subr.mxu0 0.0
    %503 = vmatpush2.msra.mxu0 0.0
    %504 = vmatprep.subr.mxu0 0.0
    %505 = vmatpush2.msra.mxu0 0.0
    %506 = vmatprep.subr.mxu0 0.0
    %507 = vmatpush2.msra.mxu0 0.0
    %508 = vmatprep.subr.mxu0 0.0
    %509 = vmatpush2.msra.mxu0 0.0
    %510 = vmatprep.mubr.f32.mxu0 0.0
    %511 = vmatmul.mubr.f32.gmra.mxu0 %v441
    %v512 = vpop.f32.mrf.mxu0
    %v513 = vadd.f32 %v438, %v512
    %v514 = vpop.f32.mrf.mxu0
    %515 = vmatprep.mubr.f32.mxu0 0.0
    %516 = vmatmul.mubr.f32.gmra.mxu0 %v444
    %v517 = vpop.f32.mrf.mxu0
    %v518 = vadd.f32 %v438, %v517
    %v519 = vpop.f32.mrf.mxu0
    %520 = vdwg.mxu0
    %521 = vst [vmem:[#allocation16] sm:$0xff] %v513
    %522 = vst [vmem:[#allocation16 + $0x8] sm:$0xff] %v518
    // Predicated region
    $region82: #{tpu_custom_call.1} parent=1 // pred_check
      _
    $region83: #{tpu_custom_call.1} parent=1 // pred_check_branch
      %524 = sbr.rel (0) target = $region85
    $region84: #{tpu_custom_call.1} parent=1 // pred_region
      %s526 = ssub.s32 256, 256
      %527 = vsyncadd [#allocation4], %s526
      %s528 = sshll.u32 [#allocation16], 4
      %s529 = int_to_ptr.vmem [resolvable:$true] %s528
      %534 = dma.vmem_to_hbm [thread:$0]  %s529, 256, %s12, [#allocation4], 128, 128, 8
    $region85: #{tpu_custom_call.1} parent=1 // pred_fallthru
      _
    // Predicated region
    $region86: #{tpu_custom_call.1} parent=1 // pred_check
      _
    $region87: #{tpu_custom_call.1} parent=1 // pred_check_branch
      %536 = sbr.rel (0) target = $region89
    $region88: #{tpu_custom_call.1} parent=1 // pred_region
      %537 = dma.done [#allocation4], 256
    $region89: #{tpu_custom_call.1} parent=1 // pred_fallthru
      _
    %538 = vsyncpa [#allocation3], 1
    %539 = vsyncpa [#allocation6], 1
    %540 = vsyncpa [#allocation9], 1
    %541 = vsyncpa [#allocation12], 1
    %542 = vsyncpa [#allocation15], 1
    %543 = vsyncpa [#allocation4], 1

</llo_original>
